<compile_context>
chip_gen: v5e
topology: v5e:2x2
jax: 0.10.0
libtpu: 0.0.40
codegen_flags: <defaults>
</compile_context>

<pallas_src>
import jax
import jax.numpy as jnp
from jax.experimental import pallas as pl
from jax.experimental.pallas import tpu as pltpu


def _round_up(x, m):
    return (x + m - 1) // m * m


def _decoder_mlp_kernel(z_ref, w1_ref, b1_ref, w2_ref, b2_ref, w3_ref, b3_ref,
                        o_ref):
    # Layer 1: Linear + ReLU (f32 accumulation on the MXU).
    h = jnp.dot(z_ref[...], w1_ref[...],
                preferred_element_type=jnp.float32) + b1_ref[...]
    h = jnp.maximum(h, 0.0)
    # Layer 2: Linear + ReLU.
    h = jnp.dot(h.astype(w2_ref.dtype), w2_ref[...],
                preferred_element_type=jnp.float32) + b2_ref[...]
    h = jnp.maximum(h, 0.0)
    # Layer 3 (output): Linear + Sigmoid (sigmoid in f32, lane-dense store).
    h = jnp.dot(h.astype(w3_ref.dtype), w3_ref[...],
                preferred_element_type=jnp.float32) + b3_ref[...]
    o_ref[...] = jax.nn.sigmoid(h).astype(o_ref.dtype)


def decoder_forward(z, params, *, batch_tile=256, compute_dtype=jnp.float32):
    """Run the Decoder MLP as one fused Pallas kernel.

    z:       (B, latent_dim) float32
    params:  dict with w1,b1,w2,b2,w3,b3 (weights stored as (in, out),
             biases (1, out)), matching torch.nn.Linear semantics y = x@W + b.
    compute_dtype: jnp.float32 (exact) or jnp.bfloat16 (halves HBM streaming of
             z / weights on v6e / v7x; accumulation & sigmoid stay f32).
    """
    w1, b1 = params["w1"], params["b1"]
    w2, b2 = params["w2"], params["b2"]
    w3, b3 = params["w3"], params["b3"]

    B, latent_dim = z.shape
    h1 = w1.shape[1]
    h2 = w2.shape[1]
    state_dim = w3.shape[1]

    LANE = 128
    # Pad feature dims to the 128-lane width: full MXU tiles, unmasked loads,
    # lane-dense output stores.
    lat_p = _round_up(latent_dim, LANE)
    h1_p = _round_up(h1, LANE)
    h2_p = _round_up(h2, LANE)
    st_p = _round_up(state_dim, LANE)

    # Batch tile: multiple of 8 sublanes, no larger than the (padded) batch.
    bt = max(8, min(_round_up(batch_tile, 8), _round_up(B, 8)))
    B_p = _round_up(B, bt)

    f32 = jnp.float32
    zp = jnp.zeros((B_p, lat_p), f32).at[:B, :latent_dim].set(z.astype(f32))
    w1p = jnp.zeros((lat_p, h1_p), f32).at[:latent_dim, :h1].set(w1)
    w2p = jnp.zeros((h1_p, h2_p), f32).at[:h1, :h2].set(w2)
    w3p = jnp.zeros((h2_p, st_p), f32).at[:h2, :state_dim].set(w3)
    b1p = jnp.zeros((1, h1_p), f32).at[:, :h1].set(b1.reshape(1, -1))
    b2p = jnp.zeros((1, h2_p), f32).at[:, :h2].set(b2.reshape(1, -1))
    b3p = jnp.zeros((1, st_p), f32).at[:, :state_dim].set(b3.reshape(1, -1))

    # Optional bf16 streaming (biases stay f32; accumulation is f32 in-kernel).
    if compute_dtype != jnp.float32:
        zp = zp.astype(compute_dtype)
        w1p = w1p.astype(compute_dtype)
        w2p = w2p.astype(compute_dtype)
        w3p = w3p.astype(compute_dtype)

    grid = (B_p // bt,)
    itemsize = jnp.dtype(compute_dtype).itemsize

    # Explicit VMEM budget: double-buffered z/out tiles + (grid-constant,
    # double-buffered) weights/biases + headroom, capped well under v7x's
    # 64 MiB physical VMEM.
    weight_bytes = ((w1p.size + w2p.size + w3p.size) * itemsize
                    + (b1p.size + b2p.size + b3p.size) * 4)
    io_bytes = 2 * (bt * lat_p * itemsize) + 2 * (bt * st_p * 4)
    vmem_limit = min(int(1.5 * (io_bytes + 2 * weight_bytes)) + (8 << 20),
                     48 << 20)

    flops = 2 * B_p * (lat_p * h1_p + h1_p * h2_p + h2_p * st_p)
    bytes_accessed = int(B_p * lat_p * itemsize + B_p * st_p * 4 + weight_bytes)
    cost = pl.CostEstimate(flops=flops,
                           transcendentals=B_p * st_p,
                           bytes_accessed=bytes_accessed)

    # Weights / biases use the same block for every grid step (constant
    # index_map), so they stay resident in VMEM across the batch loop.
    rep = lambda shape: pl.BlockSpec(shape, lambda i: (0, 0))

    out_p = pl.pallas_call(
        _decoder_mlp_kernel,
        out_shape=jax.ShapeDtypeStruct((B_p, st_p), jnp.float32),
        grid_spec=pl.GridSpec(
            grid=grid,
            in_specs=[
                pl.BlockSpec((bt, lat_p), lambda i: (i, 0)),   # z tile
                rep((lat_p, h1_p)), rep((1, h1_p)),            # layer 1
                rep((h1_p, h2_p)), rep((1, h2_p)),             # layer 2
                rep((h2_p, st_p)), rep((1, st_p)),             # layer 3
            ],
            out_specs=pl.BlockSpec((bt, st_p), lambda i: (i, 0)),
        ),
        compiler_params=pltpu.CompilerParams(
            dimension_semantics=("parallel",),
            vmem_limit_bytes=vmem_limit),
        cost_estimate=cost,
    )(zp, w1p, b1p, w2p, b2p, w3p, b3p)

    # Strip batch / state padding (lane-dense store happened in-kernel).
    return out_p[:B, :state_dim]


def init_decoder_params(key, latent_dim, state_dim, hidden_dims):
    """Deterministic synthetic init mimicking nn.Linear shapes.

    torch.nn.Linear(in, out) has weight (out, in); we store the transpose
    (in, out) so the kernel computes y = x @ W + b.
    """
    dims = [latent_dim] + list(hidden_dims) + [state_dim]
    params = {}
    for idx in range(len(dims) - 1):
        key, kw, kb = jax.random.split(key, 3)
        fan_in = dims[idx]
        bound = 1.0 / jnp.sqrt(fan_in)
        w = jax.random.uniform(kw, (dims[idx], dims[idx + 1]),
                               minval=-bound, maxval=bound, dtype=jnp.float32)
        b = jax.random.uniform(kb, (1, dims[idx + 1]),
                               minval=-bound, maxval=bound, dtype=jnp.float32)
        params[f"w{idx + 1}"] = w
        params[f"b{idx + 1}"] = b
    return params


def decoder_reference(z, params):
    """Pure-JAX reference for correctness checking."""
    h = jnp.maximum(z @ params["w1"] + params["b1"], 0.0)
    h = jnp.maximum(h @ params["w2"] + params["b2"], 0.0)
    return jax.nn.sigmoid(h @ params["w3"] + params["b3"])


if __name__ == "__main__":
    # Small shapes consistent with Decoder(state_dim, latent_dim, hidden_dims)
    batch = 8
    latent_dim = 8
    state_dim = 16
    hidden_dims = [32, 32]

    key = jax.random.PRNGKey(0)
    key, kz = jax.random.split(key)
    z = jax.random.normal(kz, (batch, latent_dim), dtype=jnp.float32)

    params = init_decoder_params(key, latent_dim, state_dim, hidden_dims)

    out = decoder_forward(z, params)            # f32 compute: exact parity
    out = jax.block_until_ready(out)

    ref = decoder_reference(z, params)
    assert out.shape == (batch, state_dim)
    assert jnp.allclose(out, ref, atol=1e-5, rtol=1e-5), "mismatch vs reference"

    # Also exercise a ragged batch (no divisibility requirement).
    z2 = jax.random.normal(key, (13, latent_dim), dtype=jnp.float32)
    out2 = jax.block_until_ready(decoder_forward(z2, params, batch_tile=256))
    ref2 = decoder_reference(z2, params)
    assert out2.shape == (13, state_dim)
    assert jnp.allclose(out2, ref2, atol=1e-5, rtol=1e-5), "ragged mismatch"

    print("KERNEL_OK")
</pallas_src>

<mosaic_0001>
module attributes {stable_mosaic.version = 11 : i64} {
  func.func @_decoder_mlp_kernel(%arg0: i32, %arg1: memref<8x128xf32, #tpu.memory_space<vmem>>, %arg2: memref<128x128xf32, #tpu.memory_space<vmem>>, %arg3: memref<1x128xf32, #tpu.memory_space<vmem>>, %arg4: memref<128x128xf32, #tpu.memory_space<vmem>>, %arg5: memref<1x128xf32, #tpu.memory_space<vmem>>, %arg6: memref<128x128xf32, #tpu.memory_space<vmem>>, %arg7: memref<1x128xf32, #tpu.memory_space<vmem>>, %arg8: memref<8x128xf32, #tpu.memory_space<vmem>>) attributes {dimension_semantics = [#tpu.dimension_semantics<parallel>], iteration_bounds = array<i64: 1>, scalar_prefetch = 0 : i64, scratch_operands = 0 : i64, tpu.core_type = #tpu.core_type<tc>, window_params = [{transform_indices = @transform_0, window_bounds = array<i64: 8, 128>}, {pipeline_mode = #tpu.pipeline_mode<synchronous>, transform_indices = @transform_1, window_bounds = array<i64: 128, 128>}, {pipeline_mode = #tpu.pipeline_mode<synchronous>, transform_indices = @transform_2, window_bounds = array<i64: 1, 128>}, {pipeline_mode = #tpu.pipeline_mode<synchronous>, transform_indices = @transform_3, window_bounds = array<i64: 128, 128>}, {pipeline_mode = #tpu.pipeline_mode<synchronous>, transform_indices = @transform_4, window_bounds = array<i64: 1, 128>}, {pipeline_mode = #tpu.pipeline_mode<synchronous>, transform_indices = @transform_5, window_bounds = array<i64: 128, 128>}, {pipeline_mode = #tpu.pipeline_mode<synchronous>, transform_indices = @transform_6, window_bounds = array<i64: 1, 128>}, {transform_indices = @transform_7, window_bounds = array<i64: 8, 128>}]} {
    %c0 = arith.constant 0 : index
    %c0_0 = arith.constant 0 : index
    %0 = vector.load %arg1[%c0, %c0_0] : memref<8x128xf32, #tpu.memory_space<vmem>>, vector<8x128xf32>
    %c0_1 = arith.constant 0 : index
    %c0_2 = arith.constant 0 : index
    %1 = vector.load %arg2[%c0_1, %c0_2] : memref<128x128xf32, #tpu.memory_space<vmem>>, vector<128x128xf32>
    %cst = arith.constant dense<0.000000e+00> : vector<8x128xf32>
    %2 = tpu.matmul %0, %1, %cst {dimension_numbers = #tpu.dot_dimension_numbers<[1], [0], [0], [1], [0, 0, 1, 1], [], []>} : vector<8x128xf32>, vector<128x128xf32>, vector<8x128xf32> -> vector<8x128xf32>
    %c0_3 = arith.constant 0 : index
    %c0_4 = arith.constant 0 : index
    %3 = vector.load %arg3[%c0_3, %c0_4] : memref<1x128xf32, #tpu.memory_space<vmem>>, vector<1x128xf32>
    %4 = vector.broadcast %3 : vector<1x128xf32> to vector<8x128xf32>
    %5 = arith.addf %2, %4 : vector<8x128xf32>
    %cst_5 = arith.constant 0.000000e+00 : f32
    %6 = vector.broadcast %cst_5 : f32 to vector<8x128xf32>
    %7 = arith.maximumf %5, %6 : vector<8x128xf32>
    %c0_6 = arith.constant 0 : index
    %c0_7 = arith.constant 0 : index
    %8 = vector.load %arg4[%c0_6, %c0_7] : memref<128x128xf32, #tpu.memory_space<vmem>>, vector<128x128xf32>
    %cst_8 = arith.constant dense<0.000000e+00> : vector<8x128xf32>
    %9 = tpu.matmul %7, %8, %cst_8 {dimension_numbers = #tpu.dot_dimension_numbers<[1], [0], [0], [1], [0, 0, 1, 1], [], []>} : vector<8x128xf32>, vector<128x128xf32>, vector<8x128xf32> -> vector<8x128xf32>
    %c0_9 = arith.constant 0 : index
    %c0_10 = arith.constant 0 : index
    %10 = vector.load %arg5[%c0_9, %c0_10] : memref<1x128xf32, #tpu.memory_space<vmem>>, vector<1x128xf32>
    %11 = vector.broadcast %10 : vector<1x128xf32> to vector<8x128xf32>
    %12 = arith.addf %9, %11 : vector<8x128xf32>
    %cst_11 = arith.constant 0.000000e+00 : f32
    %13 = vector.broadcast %cst_11 : f32 to vector<8x128xf32>
    %14 = arith.maximumf %12, %13 : vector<8x128xf32>
    %c0_12 = arith.constant 0 : index
    %c0_13 = arith.constant 0 : index
    %15 = vector.load %arg6[%c0_12, %c0_13] : memref<128x128xf32, #tpu.memory_space<vmem>>, vector<128x128xf32>
    %cst_14 = arith.constant dense<0.000000e+00> : vector<8x128xf32>
    %16 = tpu.matmul %14, %15, %cst_14 {dimension_numbers = #tpu.dot_dimension_numbers<[1], [0], [0], [1], [0, 0, 1, 1], [], []>} : vector<8x128xf32>, vector<128x128xf32>, vector<8x128xf32> -> vector<8x128xf32>
    %c0_15 = arith.constant 0 : index
    %c0_16 = arith.constant 0 : index
    %17 = vector.load %arg7[%c0_15, %c0_16] : memref<1x128xf32, #tpu.memory_space<vmem>>, vector<1x128xf32>
    %18 = vector.broadcast %17 : vector<1x128xf32> to vector<8x128xf32>
    %19 = arith.addf %16, %18 : vector<8x128xf32>
    %20 = arith.negf %19 : vector<8x128xf32>
    %21 = math.exp %20 : vector<8x128xf32>
    %cst_17 = arith.constant 1.000000e+00 : f32
    %22 = vector.broadcast %cst_17 : f32 to vector<8x128xf32>
    %23 = arith.addf %22, %21 : vector<8x128xf32>
    %24 = arith.divf %22, %23 : vector<8x128xf32>
    %c0_18 = arith.constant 0 : index
    %c0_19 = arith.constant 0 : index
    %25 = vector.load %arg8[%c0_18, %c0_19] : memref<8x128xf32, #tpu.memory_space<vmem>>, vector<8x128xf32>
    tpu.vector_store %arg8[%c0_18, %c0_19], %24 {strides = array<i32>} : memref<8x128xf32, #tpu.memory_space<vmem>>, vector<8x128xf32>,
    return
  }
  func.func @transform_0(%arg0: i32) -> (i32, i32) {
    %c0_i32 = arith.constant 0 : i32
    %c0_i32_0 = arith.constant 0 : i32
    return %arg0, %c0_i32 : i32, i32
  }
  func.func @transform_1(%arg0: i32) -> (i32, i32) {
    %c0_i32 = arith.constant 0 : i32
    %c0_i32_0 = arith.constant 0 : i32
    %c0_i32_1 = arith.constant 0 : i32
    return %c0_i32, %c0_i32_0 : i32, i32
  }
  func.func @transform_2(%arg0: i32) -> (i32, i32) {
    %c0_i32 = arith.constant 0 : i32
    %c0_i32_0 = arith.constant 0 : i32
    %c0_i32_1 = arith.constant 0 : i32
    return %c0_i32, %c0_i32_0 : i32, i32
  }
  func.func @transform_3(%arg0: i32) -> (i32, i32) {
    %c0_i32 = arith.constant 0 : i32
    %c0_i32_0 = arith.constant 0 : i32
    %c0_i32_1 = arith.constant 0 : i32
    return %c0_i32, %c0_i32_0 : i32, i32
  }
  func.func @transform_4(%arg0: i32) -> (i32, i32) {
    %c0_i32 = arith.constant 0 : i32
    %c0_i32_0 = arith.constant 0 : i32
    %c0_i32_1 = arith.constant 0 : i32
    return %c0_i32, %c0_i32_0 : i32, i32
  }
  func.func @transform_5(%arg0: i32) -> (i32, i32) {
    %c0_i32 = arith.constant 0 : i32
    %c0_i32_0 = arith.constant 0 : i32
    %c0_i32_1 = arith.constant 0 : i32
    return %c0_i32, %c0_i32_0 : i32, i32
  }
  func.func @transform_6(%arg0: i32) -> (i32, i32) {
    %c0_i32 = arith.constant 0 : i32
    %c0_i32_0 = arith.constant 0 : i32
    %c0_i32_1 = arith.constant 0 : i32
    return %c0_i32, %c0_i32_0 : i32, i32
  }
  func.func @transform_7(%arg0: i32) -> (i32, i32) {
    %c0_i32 = arith.constant 0 : i32
    %c0_i32_0 = arith.constant 0 : i32
    return %arg0, %c0_i32 : i32, i32
  }
}

</mosaic_0001>

<llo_original>
// kernel: tpu_custom_call.1
$region0: #{tpu_custom_call.1}
  #allocation0 [shape = 'u32[]', space=smem, size = 0x4, offset = 0x4, fixed_abs, tag = 'smem constant byte address 0x4 - core index']
  #allocation1 [shape = 'u32[72,128]{1,0:T(1,128)}', space=vmem, size = 0x9000, scoped, tag = 'internal scratch']
  %s0 = inlined_call_operand.hbm [shape: f32[8,128], index: 0, kind: input, shape index: {}]
  %s1 = inlined_call_operand.hbm [shape: f32[128,128], index: 1, kind: input, shape index: {}]
  %s2 = inlined_call_operand.vmem [shape: f32[1,128], index: 2, kind: input, shape index: {}]
  %s3 = inlined_call_operand.hbm [shape: f32[128,128], index: 3, kind: input, shape index: {}]
  %s4 = inlined_call_operand.vmem [shape: f32[1,128], index: 4, kind: input, shape index: {}]
  %s5 = inlined_call_operand.hbm [shape: f32[128,128], index: 5, kind: input, shape index: {}]
  %s6 = inlined_call_operand.vmem [shape: f32[1,128], index: 6, kind: input, shape index: {}]
  %s7 = inlined_call_operand.hbm [shape: f32[8,128], index: 7, kind: output, shape index: {}]
  %s8 = sld [smem:[#allocation0]]
  $region54: #{tpu_custom_call.1} parent=0
    _
  %s10 = ssub.s32 1, %s8
  %s11 = scalar_select 0, %s10, %s8
  $region1: #{tpu_custom_call.1} parent=0
    #allocation2 [shape = 'u8[4096]{0}', space=vmem, size = 0x1000, scoped, tag = 'input window, operand 0, single buffered']
    #allocation3 [shape = 's32[1]{0}', space=sflag, size = 0x4, scoped, tag = 'scoped memory for tpu_custom_call.1']
    #allocation4 [shape = 's32[1]{0}', space=sflag, size = 0x4, scoped, tag = 'scoped memory for tpu_custom_call.1']
    #allocation5 [shape = 'u8[65536]{0}', space=vmem, size = 0x10000, scoped, tag = 'input window, operand 1, single buffered']
    #allocation6 [shape = 's32[1]{0}', space=sflag, size = 0x4, scoped, tag = 'scoped memory for tpu_custom_call.1']
    #allocation7 [shape = 'u8[65536]{0}', space=vmem, size = 0x10000, scoped, tag = 'input window, operand 3, single buffered']
    #allocation8 [shape = 'u8[65536]{0}', space=vmem, size = 0x10000, scoped, tag = 'input window, operand 5, single buffered']
    #allocation9 [shape = 's32[1]{0}', space=sflag, size = 0x4, scoped, tag = 'scoped memory for tpu_custom_call.1']
    #allocation10 [shape = 'u8[4096]{0}', space=vmem, size = 0x1000, scoped, tag = 'output window, operand 0, single buffered']
    %12 = vsyncpa [#allocation3], 0
    %13 = vsyncpa [#allocation6], 0
    %14 = vsyncpa [#allocation9], 0
    %15 = vsyncpa [#allocation4], 0
    // Predicated region
    $region2: #{tpu_custom_call.1} parent=1 // pred_check
      _
    $region3: #{tpu_custom_call.1} parent=1 // pred_check_branch
      %17 = sbr.rel (0) target = $region5
    $region4: #{tpu_custom_call.1} parent=1 // pred_region
      %19 = vsyncadd [#allocation3], 0
      %s21 = sshll.u32 %s0, 4
      %s22 = int_to_ptr.hbm [resolvable:$true] %s21
      %s23 = sshll.u32 [#allocation2], 4
      %s24 = int_to_ptr.vmem [resolvable:$true] %s23
      %26 = dma.hbm_to_vmem [thread:$0]  %s22, 128, %s24, [#allocation3]
    $region5: #{tpu_custom_call.1} parent=1 // pred_fallthru
      _
    // Predicated region
    $region6: #{tpu_custom_call.1} parent=1 // pred_check
      _
    $region7: #{tpu_custom_call.1} parent=1 // pred_check_branch
      %28 = sbr.rel (0) target = $region9
    $region8: #{tpu_custom_call.1} parent=1 // pred_region
      %30 = vsyncadd [#allocation6], 0
      %s31 = sshll.u32 %s1, 4
      %s32 = int_to_ptr.hbm [resolvable:$true] %s31
      %s33 = sshll.u32 [#allocation5], 4
      %s34 = int_to_ptr.vmem [resolvable:$true] %s33
      %39 = dma.hbm_to_vmem [thread:$0]  %s32, 2048, %s34, [#allocation6], 128, 128, 8
    $region9: #{tpu_custom_call.1} parent=1 // pred_fallthru
      _
    // Predicated region
    $region10: #{tpu_custom_call.1} parent=1 // pred_check
      _
    $region11: #{tpu_custom_call.1} parent=1 // pred_check_branch
      %41 = sbr.rel (0) target = $region13
    $region12: #{tpu_custom_call.1} parent=1 // pred_region
      _
    $region13: #{tpu_custom_call.1} parent=1 // pred_fallthru
      _
    // Predicated region
    $region14: #{tpu_custom_call.1} parent=1 // pred_check
      _
    $region15: #{tpu_custom_call.1} parent=1 // pred_check_branch
      %43 = sbr.rel (0) target = $region17
    $region16: #{tpu_custom_call.1} parent=1 // pred_region
      %45 = vsyncadd [#allocation6], 0
      %s46 = sshll.u32 %s3, 4
      %s47 = int_to_ptr.hbm [resolvable:$true] %s46
      %s48 = sshll.u32 [#allocation7], 4
      %s49 = int_to_ptr.vmem [resolvable:$true] %s48
      %54 = dma.hbm_to_vmem [thread:$0]  %s47, 2048, %s49, [#allocation6], 128, 128, 8
    $region17: #{tpu_custom_call.1} parent=1 // pred_fallthru
      _
    // Predicated region
    $region18: #{tpu_custom_call.1} parent=1 // pred_check
      _
    $region19: #{tpu_custom_call.1} parent=1 // pred_check_branch
      %56 = sbr.rel (0) target = $region21
    $region20: #{tpu_custom_call.1} parent=1 // pred_region
      _
    $region21: #{tpu_custom_call.1} parent=1 // pred_fallthru
      _
    // Predicated region
    $region22: #{tpu_custom_call.1} parent=1 // pred_check
      _
    $region23: #{tpu_custom_call.1} parent=1 // pred_check_branch
      %58 = sbr.rel (0) target = $region25
    $region24: #{tpu_custom_call.1} parent=1 // pred_region
      %60 = vsyncadd [#allocation9], 0
      %s61 = sshll.u32 %s5, 4
      %s62 = int_to_ptr.hbm [resolvable:$true] %s61
      %s63 = sshll.u32 [#allocation8], 4
      %s64 = int_to_ptr.vmem [resolvable:$true] %s63
      %69 = dma.hbm_to_vmem [thread:$0]  %s62, 2048, %s64, [#allocation9], 128, 128, 8
    $region25: #{tpu_custom_call.1} parent=1 // pred_fallthru
      _
    // Predicated region
    $region26: #{tpu_custom_call.1} parent=1 // pred_check
      _
    $region27: #{tpu_custom_call.1} parent=1 // pred_check_branch
      %71 = sbr.rel (0) target = $region29
    $region28: #{tpu_custom_call.1} parent=1 // pred_region
      _
    $region29: #{tpu_custom_call.1} parent=1 // pred_fallthru
      _
    // Predicated region
    $region30: #{tpu_custom_call.1} parent=1 // pred_check
      _
    $region31: #{tpu_custom_call.1} parent=1 // pred_check_branch
      %73 = sbr.rel (0) target = $region33
    $region32: #{tpu_custom_call.1} parent=1 // pred_region
      %75 = dma.done [#allocation3], 128
    $region33: #{tpu_custom_call.1} parent=1 // pred_fallthru
      _
    // Predicated region
    $region34: #{tpu_custom_call.1} parent=1 // pred_check
      _
    $region35: #{tpu_custom_call.1} parent=1 // pred_check_branch
      %77 = sbr.rel (0) target = $region37
    $region36: #{tpu_custom_call.1} parent=1 // pred_region
      %79 = dma.done [#allocation6], 2048
    $region37: #{tpu_custom_call.1} parent=1 // pred_fallthru
      _
    // Predicated region
    $region38: #{tpu_custom_call.1} parent=1 // pred_check
      _
    $region39: #{tpu_custom_call.1} parent=1 // pred_check_branch
      %81 = sbr.rel (0) target = $region41
    $region40: #{tpu_custom_call.1} parent=1 // pred_region
      %83 = dma.done [#allocation6], 2048
    $region41: #{tpu_custom_call.1} parent=1 // pred_fallthru
      _
    // Predicated region
    $region42: #{tpu_custom_call.1} parent=1 // pred_check
      _
    $region43: #{tpu_custom_call.1} parent=1 // pred_check_branch
      %85 = sbr.rel (0) target = $region45
    $region44: #{tpu_custom_call.1} parent=1 // pred_region
      %87 = dma.done [#allocation9], 2048
    $region45: #{tpu_custom_call.1} parent=1 // pred_fallthru
      _
    %v88 = vld [vmem:[#allocation2] sm:$0xff]
    %v89 = vld [vmem:[#allocation5] sm:$0xff]
    %v90 = vld [vmem:[#allocation5 + $0x8] sm:$0xff]
    %v91 = vld [vmem:[#allocation5 + $0x10] sm:$0xff]
    %v92 = vld [vmem:[#allocation5 + $0x18] sm:$0xff]
    %v93 = vld [vmem:[#allocation5 + $0x20] sm:$0xff]
    %v94 = vld [vmem:[#allocation5 + $0x28] sm:$0xff]
    %v95 = vld [vmem:[#allocation5 + $0x30] sm:$0xff]
    %v96 = vld [vmem:[#allocation5 + $0x38] sm:$0xff]
    %v97 = vld [vmem:[#allocation5 + $0x40] sm:$0xff]
    %v98 = vld [vmem:[#allocation5 + $0x48] sm:$0xff]
    %v99 = vld [vmem:[#allocation5 + $0x50] sm:$0xff]
    %v100 = vld [vmem:[#allocation5 + $0x58] sm:$0xff]
    %v101 = vld [vmem:[#allocation5 + $0x60] sm:$0xff]
    %v102 = vld [vmem:[#allocation5 + $0x68] sm:$0xff]
    %v103 = vld [vmem:[#allocation5 + $0x70] sm:$0xff]
    %v104 = vld [vmem:[#allocation5 + $0x78] sm:$0xff]
    %v105 = vld [vmem:[%s2] sm:$0x1]
    %v107 = vperm.slane %v105, 0
    %109 = vmatpush.msra.mxu0 %v104
    %110 = vmatpush.msra.mxu0 %v103
    %111 = vmatpush.msra.mxu0 %v102
    %112 = vmatpush.msra.mxu0 %v101
    %113 = vmatpush.msra.mxu0 %v100
    %114 = vmatpush.msra.mxu0 %v99
    %115 = vmatpush.msra.mxu0 %v98
    %116 = vmatpush.msra.mxu0 %v97
    %117 = vmatpush.msra.mxu0 %v96
    %118 = vmatpush.msra.mxu0 %v95
    %119 = vmatpush.msra.mxu0 %v94
    %120 = vmatpush.msra.mxu0 %v93
    %121 = vmatpush.msra.mxu0 %v92
    %122 = vmatpush.msra.mxu0 %v91
    %123 = vmatpush.msra.mxu0 %v90
    %124 = vmatpush.msra.mxu0 %v89
    %125 = vmatmul.f32.gmra.mxu0 %v88
    %v126 = vpop.f32.mrf.mxu0
    %v127 = vadd.f32 %v107, %v126
    %128 = vdwg.mxu0
    %v129 = vmax.f32 %v127, 0.0
    %v130 = vld [vmem:[#allocation7] sm:$0xff]
    %v131 = vld [vmem:[#allocation7 + $0x8] sm:$0xff]
    %v132 = vld [vmem:[#allocation7 + $0x10] sm:$0xff]
    %v133 = vld [vmem:[#allocation7 + $0x18] sm:$0xff]
    %v134 = vld [vmem:[#allocation7 + $0x20] sm:$0xff]
    %v135 = vld [vmem:[#allocation7 + $0x28] sm:$0xff]
    %v136 = vld [vmem:[#allocation7 + $0x30] sm:$0xff]
    %v137 = vld [vmem:[#allocation7 + $0x38] sm:$0xff]
    %v138 = vld [vmem:[#allocation7 + $0x40] sm:$0xff]
    %v139 = vld [vmem:[#allocation7 + $0x48] sm:$0xff]
    %v140 = vld [vmem:[#allocation7 + $0x50] sm:$0xff]
    %v141 = vld [vmem:[#allocation7 + $0x58] sm:$0xff]
    %v142 = vld [vmem:[#allocation7 + $0x60] sm:$0xff]
    %v143 = vld [vmem:[#allocation7 + $0x68] sm:$0xff]
    %v144 = vld [vmem:[#allocation7 + $0x70] sm:$0xff]
    %v145 = vld [vmem:[#allocation7 + $0x78] sm:$0xff]
    %v146 = vld [vmem:[%s4] sm:$0x1]
    %v148 = vperm.slane %v146, 0
    %150 = vmatpush.msra.mxu0 %v145
    %151 = vmatpush.msra.mxu0 %v144
    %152 = vmatpush.msra.mxu0 %v143
    %153 = vmatpush.msra.mxu0 %v142
    %154 = vmatpush.msra.mxu0 %v141
    %155 = vmatpush.msra.mxu0 %v140
    %156 = vmatpush.msra.mxu0 %v139
    %157 = vmatpush.msra.mxu0 %v138
    %158 = vmatpush.msra.mxu0 %v137
    %159 = vmatpush.msra.mxu0 %v136
    %160 = vmatpush.msra.mxu0 %v135
    %161 = vmatpush.msra.mxu0 %v134
    %162 = vmatpush.msra.mxu0 %v133
    %163 = vmatpush.msra.mxu0 %v132
    %164 = vmatpush.msra.mxu0 %v131
    %165 = vmatpush.msra.mxu0 %v130
    %166 = vmatmul.f32.gmra.mxu0 %v129
    %v167 = vpop.f32.mrf.mxu0
    %v168 = vadd.f32 %v148, %v167
    %169 = vdwg.mxu0
    %v170 = vmax.f32 %v168, 0.0
    %v171 = vld [vmem:[#allocation8] sm:$0xff]
    %v172 = vld [vmem:[#allocation8 + $0x8] sm:$0xff]
    %v173 = vld [vmem:[#allocation8 + $0x10] sm:$0xff]
    %v174 = vld [vmem:[#allocation8 + $0x18] sm:$0xff]
    %v175 = vld [vmem:[#allocation8 + $0x20] sm:$0xff]
    %v176 = vld [vmem:[#allocation8 + $0x28] sm:$0xff]
    %v177 = vld [vmem:[#allocation8 + $0x30] sm:$0xff]
    %v178 = vld [vmem:[#allocation8 + $0x38] sm:$0xff]
    %v179 = vld [vmem:[#allocation8 + $0x40] sm:$0xff]
    %v180 = vld [vmem:[#allocation8 + $0x48] sm:$0xff]
    %v181 = vld [vmem:[#allocation8 + $0x50] sm:$0xff]
    %v182 = vld [vmem:[#allocation8 + $0x58] sm:$0xff]
    %v183 = vld [vmem:[#allocation8 + $0x60] sm:$0xff]
    %v184 = vld [vmem:[#allocation8 + $0x68] sm:$0xff]
    %v185 = vld [vmem:[#allocation8 + $0x70] sm:$0xff]
    %v186 = vld [vmem:[#allocation8 + $0x78] sm:$0xff]
    %v187 = vld [vmem:[%s6] sm:$0x1]
    %v189 = vperm.slane %v187, 0
    %191 = vmatpush.msra.mxu0 %v186
    %192 = vmatpush.msra.mxu0 %v185
    %193 = vmatpush.msra.mxu0 %v184
    %194 = vmatpush.msra.mxu0 %v183
    %195 = vmatpush.msra.mxu0 %v182
    %196 = vmatpush.msra.mxu0 %v181
    %197 = vmatpush.msra.mxu0 %v180
    %198 = vmatpush.msra.mxu0 %v179
    %199 = vmatpush.msra.mxu0 %v178
    %200 = vmatpush.msra.mxu0 %v177
    %201 = vmatpush.msra.mxu0 %v176
    %202 = vmatpush.msra.mxu0 %v175
    %203 = vmatpush.msra.mxu0 %v174
    %204 = vmatpush.msra.mxu0 %v173
    %205 = vmatpush.msra.mxu0 %v172
    %206 = vmatpush.msra.mxu0 %v171
    %207 = vmatmul.f32.gmra.mxu0 %v170
    %v208 = vpop.f32.mrf.mxu0
    %v209 = vadd.f32 %v189, %v208
    %210 = vdwg.mxu0
    %v211 = vxor.u32 %v209, 2147483648
    %v212 = vmul.f32 %v211, 1.442695
    %v213 = vpow.pop %v212
    %v214 = vadd.f32 %v213, 1.0
    %v215 = vrcp.pop %v214
    %v216 = vmul.f32 %v214, %v215
    %v217 = vsub.f32 1.0, %v216
    %v218 = vmul.f32 %v215, %v217
    %v219 = vadd.f32 %v215, %v218
    %vm220 = vweird.f32 %v214
    %vm221 = vweird.f32 %v215
    %vm222 = vmor %vm220, %vm221
    %v223 = vsel %vm222, %v215, %v219
    %v224 = vand.u32 2147483647, %v214
    %vm225 = vcmp.eq.f32.partialorder %v224, 8.507059e+37
    %v226 = vand.u32 %v214, 2147483648
    %v227 = vor.u32 1.1754944e-38, %v226
    %v228 = vsel %vm225, %v227, %v223
    %v229 = vmul.f32 1.0, %v228
    %230 = vst [vmem:[#allocation10] sm:$0xff] %v229
    // Predicated region
    $region46: #{tpu_custom_call.1} parent=1 // pred_check
      _
    $region47: #{tpu_custom_call.1} parent=1 // pred_check_branch
      %232 = sbr.rel (0) target = $region49
    $region48: #{tpu_custom_call.1} parent=1 // pred_region
      %234 = vsyncadd [#allocation4], 0
      %s236 = sshll.u32 [#allocation10], 4
      %s237 = int_to_ptr.vmem [resolvable:$true] %s236
      %s238 = sshll.u32 %s7, 4
      %s239 = int_to_ptr.hbm [resolvable:$true] %s238
      %241 = dma.vmem_to_hbm [thread:$0]  %s237, 128, %s239, [#allocation4]
    $region49: #{tpu_custom_call.1} parent=1 // pred_fallthru
      _
    // Predicated region
    $region50: #{tpu_custom_call.1} parent=1 // pred_check
      _
    $region51: #{tpu_custom_call.1} parent=1 // pred_check_branch
      %243 = sbr.rel (0) target = $region53
    $region52: #{tpu_custom_call.1} parent=1 // pred_region
      %245 = dma.done [#allocation4], 128
    $region53: #{tpu_custom_call.1} parent=1 // pred_fallthru
      _
    %246 = vsyncpa [#allocation3], 1
    %247 = vsyncpa [#allocation6], 1
    %248 = vsyncpa [#allocation9], 1
    %249 = vsyncpa [#allocation4], 1

</llo_original>
